<compile_context>
chip_gen: v6e
topology: v6e:2x2x1
jax: 0.10.0
libtpu: 0.0.40
codegen_flags: <defaults>
</compile_context>

<pallas_src>
import math
from functools import partial

import jax
import jax.numpy as jnp
from jax.experimental import pallas as pl
from jax.experimental.pallas import tpu as pltpu


def _ru(x, m):
    return -(-x // m) * m


# -----------------------------------------------------------------------------
# Tiled GEMM (+ bias + activation) Pallas kernel
# -----------------------------------------------------------------------------
def _mm_kernel(a_ref, w_ref, b_ref, o_ref, acc_ref, *, act, keep):
    @pl.when(pl.program_id(2) == 0)
    def _init():
        acc_ref[...] = jnp.zeros_like(acc_ref)

    acc_ref[...] += jnp.dot(a_ref[...], w_ref[...],
                            preferred_element_type=jnp.float32)

    @pl.when(pl.program_id(2) == pl.num_programs(2) - 1)
    def _finalize():
        r = acc_ref[...] + b_ref[...]
        if act == "relu":
            r = jnp.maximum(r, 0.0)
        if keep < r.shape[1]:
            r = r[:, :keep]
        o_ref[...] = r.astype(o_ref.dtype)


def pallas_matmul_bias_act(a, w_mat, bias, act="none", out_dtype=jnp.float32):
    """a:(M,K) @ w_mat:(K,N) + bias, fused activation.  bf16 MXU, f32 acc."""
    M, K = a.shape
    K2, n_out = w_mat.shape
    assert K == K2
    tm = 128
    Kp = _ru(K, 128)
    Np = _ru(n_out, 128)
    if n_out <= 128:
        tn = 128
        out_cols = n_out
        keep = n_out
    else:
        tn = 256 if Np % 256 == 0 else 128
        keep = tn
        out_cols = n_out if n_out % 128 == 0 else Np
    tk = 512 if Kp % 512 == 0 else (256 if Kp % 256 == 0 else 128)
    Mp = _ru(M, tm)

    a_p = a.astype(jnp.bfloat16)
    if (Mp, Kp) != (M, K):
        a_p = jnp.pad(a_p, ((0, Mp - M), (0, Kp - K)))
    w_p = w_mat.astype(jnp.bfloat16)
    if (Kp, Np) != (K, n_out):
        w_p = jnp.pad(w_p, ((0, Kp - K), (0, Np - n_out)))
    if bias is None:
        bias = jnp.zeros((n_out,), jnp.float32)
    b_p = jnp.pad(bias.astype(jnp.float32), (0, Np - n_out)).reshape(1, Np)

    out = pl.pallas_call(
        partial(_mm_kernel, act=act, keep=keep),
        out_shape=jax.ShapeDtypeStruct((Mp, out_cols), out_dtype),
        grid=(Mp // tm, Np // tn, Kp // tk),
        in_specs=[
            pl.BlockSpec((tm, tk), lambda i, j, k: (i, k)),
            pl.BlockSpec((tk, tn), lambda i, j, k: (k, j)),
            pl.BlockSpec((1, tn), lambda i, j, k: (0, j)),
        ],
        out_specs=pl.BlockSpec((tm, keep), lambda i, j, k: (i, j)),
        scratch_shapes=[pltpu.VMEM((tm, tn), jnp.float32)],
        compiler_params=pltpu.CompilerParams(
            dimension_semantics=("parallel", "parallel", "arbitrary"),
            vmem_limit_bytes=32 * 1024 * 1024),
    )(a_p, w_p, b_p)

    if Mp != M:
        out = out[:M]
    if out_cols != n_out:
        out = out[:, :n_out]
    return out


# -----------------------------------------------------------------------------
# Conv glue (im2col in bf16, tiled GEMM in Pallas)
# -----------------------------------------------------------------------------
def _conv_out_size(H, k, stride, padding, dilation):
    return (H + 2 * padding - dilation * (k - 1) - 1) // stride + 1


def conv2d(x, w, b=None, stride=1, padding=1, dilation=1, act="none",
           nhwc_in=False, nhwc_out=False, out_dtype=None):
    """x: NCHW (or NHWC when nhwc_in=True); w: torch layout (Cout,Cin,kh,kw)."""
    if out_dtype is None:
        out_dtype = jnp.bfloat16 if act == "relu" else jnp.float32
    x_cl = x if nhwc_in else x.transpose(0, 2, 3, 1)
    B, H, W, Cin = x_cl.shape
    Cout, _, kh, kw = w.shape
    Ho = _conv_out_size(H, kh, stride, padding, dilation)
    Wo = _conv_out_size(W, kw, stride, padding, dilation)

    if kh == 1 and kw == 1 and stride == 1 and padding == 0:
        a = x_cl.reshape(B * H * W, Cin)
    else:
        # TODO(synk): fold the kh*kw taps into the GEMM K grid axis (shifted-window
        # index_map over the padded NHWC activation) instead of materializing copies.
        xb = x_cl.astype(jnp.bfloat16)
        if padding:
            xb = jnp.pad(xb, ((0, 0), (padding, padding),
                              (padding, padding), (0, 0)))
        cols = []
        for i in range(kh):
            for j in range(kw):
                hs, ws = i * dilation, j * dilation
                cols.append(jax.lax.slice(
                    xb, (0, hs, ws, 0),
                    (B, hs + (Ho - 1) * stride + 1,
                     ws + (Wo - 1) * stride + 1, Cin),
                    (1, stride, stride, 1)))
        a = jnp.concatenate(cols, axis=-1).reshape(B * Ho * Wo, kh * kw * Cin)

    wm = w.transpose(0, 2, 3, 1).reshape(Cout, kh * kw * Cin).T
    out = pallas_matmul_bias_act(a, wm, b, act=act, out_dtype=out_dtype)
    out = out.reshape(B, Ho, Wo, Cout)
    return out if nhwc_out else out.transpose(0, 3, 1, 2)


def conv_transpose2d_x2(x_nhwc, w_t):
    """ConvTranspose2d(k=3, stride=2, padding=1, output_padding=1, bias=False).

    Sub-pixel decomposition: one GEMM over 4 shifted taps of the original-res
    input, phase outputs interleaved afterwards.  NHWC in / NHWC (bf16) out."""
    B, H, W, Cin = x_nhwc.shape
    Cout = w_t.shape[1]
    xp = jnp.pad(x_nhwc.astype(jnp.bfloat16), ((0, 0), (0, 1), (0, 1), (0, 0)))
    t00 = xp[:, :H, :W]
    t01 = xp[:, :H, 1:W + 1]
    t10 = xp[:, 1:H + 1, :W]
    t11 = xp[:, 1:H + 1, 1:W + 1]
    a = jnp.concatenate([t00, t01, t10, t11], axis=-1).reshape(B * H * W, 4 * Cin)

    wt = w_t.astype(jnp.float32)                 # (Cin, Cout, 3, 3)
    z = jnp.zeros((Cin, Cout), jnp.float32)
    col00 = jnp.concatenate([wt[:, :, 1, 1], z, z, z], axis=0)
    col01 = jnp.concatenate([wt[:, :, 1, 2], wt[:, :, 1, 0], z, z], axis=0)
    col10 = jnp.concatenate([wt[:, :, 2, 1], z, wt[:, :, 0, 1], z], axis=0)
    col11 = jnp.concatenate([wt[:, :, 2, 2], wt[:, :, 2, 0],
                             wt[:, :, 0, 2], wt[:, :, 0, 0]], axis=0)
    wmat = jnp.concatenate([col00, col01, col10, col11], axis=1)   # (4Cin,4Cout)

    out = pallas_matmul_bias_act(a, wmat, None, act="none",
                                 out_dtype=jnp.bfloat16)
    out = out.reshape(B, H, W, 2, 2, Cout).transpose(0, 1, 3, 2, 4, 5)
    return out.reshape(B, 2 * H, 2 * W, Cout)


# -----------------------------------------------------------------------------
# Group correlation kernel (ref block reused across depth samples)
# -----------------------------------------------------------------------------
def _group_corr_kernel(w_ref, r_ref, o_ref, *, cg):
    acc = w_ref[0, 0, 0] * r_ref[0, 0, 0]
    for c in range(1, cg):
        acc = acc + w_ref[0, 0, c] * r_ref[0, 0, c]
    o_ref[0, 0] = acc * (1.0 / cg)


def group_correlation(warped, ref, G):
    """warped:(B,C,N,H,W), ref:(B,C,H,W) -> mean over C//G channels: (B,G,N,H,W)."""
    B, C, N, H, W = warped.shape
    cg = C // G
    L = H * W
    w5 = warped.reshape(B, G, cg, N, L).astype(jnp.float32)
    r5 = ref.reshape(B, G, cg, 1, L).astype(jnp.float32)

    if L % 128 == 0:
        Lp = L
        TL = 128
        for cand in (2048, 1024, 512, 256, 128):
            if L % cand == 0:
                TL = cand
                break
    elif L <= 2048:
        TL = Lp = L
    else:
        TL = 512
        Lp = _ru(L, TL)
        w5 = jnp.pad(w5, ((0, 0),) * 4 + ((0, Lp - L),))
        r5 = jnp.pad(r5, ((0, 0),) * 4 + ((0, Lp - L),))

    out = pl.pallas_call(
        partial(_group_corr_kernel, cg=cg),
        out_shape=jax.ShapeDtypeStruct((B, G, N, Lp), jnp.float32),
        grid=(B, G, Lp // TL),
        in_specs=[
            pl.BlockSpec((1, 1, cg, N, TL), lambda b, g, lt: (b, g, 0, 0, lt)),
            pl.BlockSpec((1, 1, cg, 1, TL), lambda b, g, lt: (b, g, 0, 0, lt)),
        ],
        out_specs=pl.BlockSpec((1, 1, N, TL), lambda b, g, lt: (b, g, 0, lt)),
        compiler_params=pltpu.CompilerParams(
            dimension_semantics=("parallel", "parallel", "parallel")),
    )(w5, r5)
    return out[..., :L].reshape(B, G, N, H, W)


# -----------------------------------------------------------------------------
# Row-tiled softmax-expectation / windowed depth regression kernels
# -----------------------------------------------------------------------------
def _softmax_expect_kernel(x_ref, o_ref):
    x = x_ref[...]
    m = jnp.max(x, axis=-1, keepdims=True)
    e = jnp.exp(x - m)
    idx = jax.lax.broadcasted_iota(jnp.float32, x.shape, 1)
    num = jnp.sum(idx * e, axis=-1, keepdims=True)
    o_ref[...] = num * pl.reciprocal(jnp.sum(e, axis=-1, keepdims=True),
                                     approx=True)


def softmax_expectation(x):
    """x:(B,C,H,W) -> expected channel index (B,1,H,W)."""
    # TODO(synk): pack the per-row scalar outputs into a lane-dense slab to avoid
    # the masked (TM,1) store epilogue; negligible at these sizes.
    B, C, H, W = x.shape
    M = B * H * W
    xm = x.transpose(0, 2, 3, 1).reshape(M, C)
    TM = max(8, min(4096, _ru(M, 8)))
    Mp = _ru(M, TM)
    if Mp != M:
        xm = jnp.pad(xm, ((0, Mp - M), (0, 0)))
    out = pl.pallas_call(
        _softmax_expect_kernel,
        out_shape=jax.ShapeDtypeStruct((Mp, 1), jnp.float32),
        grid=(Mp // TM,),
        in_specs=[pl.BlockSpec((TM, C), lambda i: (i, 0))],
        out_specs=pl.BlockSpec((TM, 1), lambda i: (i, 0)),
        compiler_params=pltpu.CompilerParams(dimension_semantics=("parallel",)),
    )(xm)
    return out[:M].reshape(B, H, W, 1).transpose(0, 3, 1, 2)


def _depth_regress_kernel(x_ref, *out_refs, radius, nsamp, want_prob):
    x = x_ref[...]
    m = jnp.max(x, axis=-1, keepdims=True)
    e = jnp.exp(x - m)
    se = jnp.sum(e, axis=-1, keepdims=True)
    idx = jax.lax.broadcasted_iota(jnp.float32, x.shape, 1)
    # first argmax (softmax is monotone -> argmax of logits)
    amax = jnp.min(jnp.where(x >= m, idx, float(nsamp)), axis=-1, keepdims=True)
    low = amax - float(radius)
    win = float(2 * radius)
    base = jnp.where((idx >= low) & (idx <= low + win), 1.0, 0.0)
    extra0 = jnp.where(idx == 0.0, jnp.maximum(-low, 0.0), 0.0)
    extraN = jnp.where(idx == float(nsamp - 1),
                       jnp.maximum(low + win - float(nsamp - 1), 0.0), 0.0)
    cnt = base + extra0 + extraN          # gather-with-clamp duplicate counts
    # softmax normalization cancels between regress and psum (1e-6*se keeps the
    # epsilon semantics of the reference).
    regress = jnp.sum(idx * e * cnt, axis=-1, keepdims=True)
    psum = 1e-6 * se + jnp.sum(e * cnt, axis=-1, keepdims=True)
    out_refs[0][...] = (regress * pl.reciprocal(psum, approx=True)
                        * (1.0 / float(nsamp - 1)))
    if want_prob:
        out_refs[1][...] = e * pl.reciprocal(se, approx=True)


def depth_regression(logits_nhwc, radius, nsamp, want_prob=True):
    """Fused softmax + windowed argmax regression over channels-last logits."""
    B, H, W, C = logits_nhwc.shape
    M = B * H * W
    xm = logits_nhwc.reshape(M, C)
    TM = max(8, min(2048, _ru(M, 8)))
    Mp = _ru(M, TM)
    if Mp != M:
        xm = jnp.pad(xm, ((0, Mp - M), (0, 0)))

    kern = partial(_depth_regress_kernel, radius=radius, nsamp=nsamp,
                   want_prob=want_prob)
    in_specs = [pl.BlockSpec((TM, C), lambda i: (i, 0))]
    d_spec = pl.BlockSpec((TM, 1), lambda i: (i, 0))
    d_sds = jax.ShapeDtypeStruct((Mp, 1), jnp.float32)
    cparams = pltpu.CompilerParams(dimension_semantics=("parallel",))
    if want_prob:
        p_spec = pl.BlockSpec((TM, C), lambda i: (i, 0))
        p_sds = jax.ShapeDtypeStruct((Mp, C), jnp.float32)
        d, p = pl.pallas_call(
            kern, out_shape=(d_sds, p_sds), grid=(Mp // TM,),
            in_specs=in_specs, out_specs=(d_spec, p_spec),
            compiler_params=cparams)(xm)
        prob = p[:M].reshape(B, H, W, C).transpose(0, 3, 1, 2)
    else:
        d = pl.pallas_call(
            kern, out_shape=d_sds, grid=(Mp // TM,),
            in_specs=in_specs, out_specs=d_spec,
            compiler_params=cparams)(xm)
        prob = None
    nd = d[:M].reshape(B, H, W, 1).transpose(0, 3, 1, 2)
    return nd, prob


# -----------------------------------------------------------------------------
# Row-tiled LSTM cell kernel (gates stay lane-dense from the GEMM, no packing)
# -----------------------------------------------------------------------------
def _lstm_cell_kernel(g_ref, b_ref, c_ref, h_out, c_out, *, cd):
    g = g_ref[...] + b_ref[...]

    def sig(v):
        return pl.reciprocal(1.0 + jnp.exp(-v), approx=True)

    i = sig(g[:, 0:cd])
    f = sig(g[:, cd:2 * cd])
    o = sig(g[:, 2 * cd:3 * cd])
    gg = jnp.tanh(g[:, 3 * cd:4 * cd])
    c = f * c_ref[...] + i * gg
    c_out[...] = c
    h_out[...] = o * jnp.tanh(c)


def lstm_cell(gates_2d, bias_2d, c_2d, cd):
    """gates/bias:(M,4*cd) NHWC-flat, c:(M,cd) -> new (h, c) as (M,cd)."""
    M = gates_2d.shape[0]
    TR = max(8, min(1024, _ru(M, 8)))
    Mp = _ru(M, TR)

    def padr(v):
        return jnp.pad(v, ((0, Mp - M), (0, 0))) if Mp != M else v

    h, c = pl.pallas_call(
        partial(_lstm_cell_kernel, cd=cd),
        out_shape=(jax.ShapeDtypeStruct((Mp, cd), jnp.float32),
                   jax.ShapeDtypeStruct((Mp, cd), jnp.float32)),
        grid=(Mp // TR,),
        in_specs=[pl.BlockSpec((TR, 4 * cd), lambda r: (r, 0)),
                  pl.BlockSpec((TR, 4 * cd), lambda r: (r, 0)),
                  pl.BlockSpec((TR, cd), lambda r: (r, 0))],
        out_specs=(pl.BlockSpec((TR, cd), lambda r: (r, 0)),
                   pl.BlockSpec((TR, cd), lambda r: (r, 0))),
        compiler_params=pltpu.CompilerParams(dimension_semantics=("parallel",)),
    )(padr(gates_2d), padr(bias_2d), padr(c_2d))
    return h[:M], c[:M]


# -----------------------------------------------------------------------------
# Plain-JAX glue (resize as matmuls, fused warping gather)
# -----------------------------------------------------------------------------
def _interp_matrix(outsz, insz):
    i = jnp.arange(outsz, dtype=jnp.float32)
    src = jnp.maximum((i + 0.5) * (insz / outsz) - 0.5, 0.0)
    i0 = jnp.floor(src)
    frac = src - i0
    i0 = jnp.minimum(i0.astype(jnp.int32), insz - 1)
    i1 = jnp.minimum(i0 + 1, insz - 1)
    rows = jnp.arange(outsz)
    m = jnp.zeros((outsz, insz), jnp.float32)
    m = m.at[rows, i0].add(1.0 - frac)
    m = m.at[rows, i1].add(frac)
    return m


def interpolate_bilinear(x, scale):
    """F.interpolate(mode='bilinear', align_corners=False) as separable matmuls."""
    B, C, H, W = x.shape
    Ho, Wo = int(math.floor(H * scale)), int(math.floor(W * scale))
    My = _interp_matrix(Ho, H)
    Mx = _interp_matrix(Wo, W)
    t = jnp.einsum("oh,bchw->bcow", My, x)
    return jnp.einsum("pw,bcow->bcop", Mx, t)


def grid_sample_bilinear(src, gx, gy):
    """F.grid_sample(bilinear, zeros padding, align_corners=True)."""
    # TODO(synk): data-dependent gather stays in XLA; a fused Pallas warp +
    # group-correlation kernel (manual DMA gather) is the next step.
    B, C, Hs, Ws = src.shape
    P = gx.shape[1]
    x = (gx + 1.0) * 0.5 * (Ws - 1)
    y = (gy + 1.0) * 0.5 * (Hs - 1)
    x0, y0 = jnp.floor(x), jnp.floor(y)
    x1, y1 = x0 + 1, y0 + 1
    wx1, wy1 = x - x0, y - y0
    wx0, wy0 = 1.0 - wx1, 1.0 - wy1

    xs = jnp.stack([x0, x1, x0, x1], axis=1)                 # (B,4,P)
    ys = jnp.stack([y0, y0, y1, y1], axis=1)
    ws = jnp.stack([wx0 * wy0, wx1 * wy0, wx0 * wy1, wx1 * wy1], axis=1)
    valid = ((xs >= 0) & (xs <= Ws - 1) & (ys >= 0) & (ys <= Hs - 1)
             ).astype(src.dtype)
    idx = (jnp.clip(ys, 0, Hs - 1).astype(jnp.int32) * Ws
           + jnp.clip(xs, 0, Ws - 1).astype(jnp.int32)).reshape(B, 1, 4 * P)
    flat = src.reshape(B, C, Hs * Ws)
    vals = jnp.take_along_axis(flat, jnp.broadcast_to(idx, (B, C, 4 * P)), axis=2)
    vals = vals.reshape(B, C, 4, P) * (ws * valid)[:, None]
    return jnp.sum(vals, axis=2)


def differentiable_warping(src_fea, src_proj, ref_proj, depth_samples):
    B, C, Hs, Ws = src_fea.shape
    _, N, H, W = depth_samples.shape
    proj = src_proj @ jnp.linalg.inv(ref_proj)
    rot, trans = proj[:, :3, :3], proj[:, :3, 3:4]
    y, x = jnp.meshgrid(jnp.arange(H, dtype=jnp.float32),
                        jnp.arange(W, dtype=jnp.float32), indexing="ij")
    xyz = jnp.stack([x.reshape(-1), y.reshape(-1),
                     jnp.ones(H * W, jnp.float32)], axis=0)           # (3,HW)
    rot_xyz = jnp.einsum("bij,jp->bip", rot, xyz)                      # (B,3,HW)
    d = depth_samples.reshape(B, 1, N, H * W)
    proj_xyz = rot_xyz[:, :, None, :] * d + trans[:, :, :, None]       # (B,3,N,HW)
    z = proj_xyz[:, 2]
    neg = z <= 1e-3
    px = jnp.where(neg, float(Ws), proj_xyz[:, 0])
    py = jnp.where(neg, float(Hs), proj_xyz[:, 1])
    pz = jnp.where(neg, 1.0, z)
    gx = px / pz / ((Ws - 1) / 2.0) - 1.0
    gy = py / pz / ((Hs - 1) / 2.0) - 1.0
    vals = grid_sample_bilinear(src_fea, gx.reshape(B, N * H * W),
                                gy.reshape(B, N * H * W))
    return vals.reshape(B, C, N, H, W)


def depth_unnormalization(nd, idmin, idmax):
    return 1.0 / (idmax + nd * (idmin - idmax))


def convex_upsample(x, weight, scale=4):
    B, _, H, W = x.shape
    xp = jnp.pad(x, ((0, 0), (0, 0), (1, 1), (1, 1)))
    nbrs = [xp[:, :, i:i + H, j:j + W] for i in range(3) for j in range(3)]
    xu = jnp.stack(nbrs, axis=2).reshape(B, 1, 9, 1, 1, H, W)
    out = jnp.sum(weight * xu, axis=2)                 # (B,1,4,4,H,W)
    out = out.transpose(0, 1, 4, 2, 5, 3).reshape(B, 1, scale * H, scale * W)
    return out


# -----------------------------------------------------------------------------
# Sub-modules
# -----------------------------------------------------------------------------
G = 8
HIDDEN_DIM = 32
NUM_SAMPLE = 32
OUT_NUM_SAMPLES = 256
RADIUS = 4


def pixel_view_weight(p, x5):
    B, g, N, H, W = x5.shape
    x = x5.transpose(0, 2, 3, 4, 1).reshape(B * N, H, W, g)
    x = conv2d(x, p["w0"], None, 1, 1, 1, "relu", nhwc_in=True, nhwc_out=True)
    x = conv2d(x, p["w1"], p["b1"], 1, 0, 1, "none", nhwc_in=True,
               nhwc_out=True, out_dtype=jnp.float32)
    x = x.reshape(B, N, H, W)
    pr = jax.nn.softmax(x, axis=1)
    return jnp.max(pr, axis=1)[:, None]                 # (B,1,H,W)


def corrnet(p, x5):
    B, g, N, H, W = x5.shape
    x = x5.transpose(0, 2, 3, 4, 1).reshape(B * N, H, W, g)
    c0 = conv2d(x, p["w0"], None, 1, 1, 1, "relu", nhwc_in=True, nhwc_out=True)
    c1 = conv2d(c0, p["w1"], None, 2, 1, 1, "relu", nhwc_in=True, nhwc_out=True)
    x2 = conv2d(c1, p["w2"], None, 2, 1, 1, "relu", nhwc_in=True, nhwc_out=True)
    x3 = c1 + conv_transpose2d_x2(x2, p["w3"])
    x4 = c0 + conv_transpose2d_x2(x3, p["w4"])
    out = conv2d(x4, p["w5"], p["b5"], 1, 1, 1, "none", nhwc_in=True,
                 nhwc_out=True, out_dtype=jnp.float32)           # (B*N,H,W,1)
    return out.reshape(B, N, H, W)


def heads_forward(p, h_nhwc, want_conf, want_prob):
    """Depth head (+ optionally confidence head) on the NHWC hidden state.
    Their first dilated 3x3 convs share one im2col and one fused GEMM."""
    conf0 = None
    if want_conf:
        w0 = jnp.concatenate([p["dh_w0"], p["ch_w0"]], axis=0)   # (64,cd,3,3)
        x0 = conv2d(h_nhwc, w0, None, 1, 2, 2, "relu",
                    nhwc_in=True, nhwc_out=True)
        nd_ch = p["dh_w0"].shape[0]
        xd, xc = x0[..., :nd_ch], x0[..., nd_ch:]
        conf0 = conv2d(xc, p["ch_w1"], p["ch_b1"], 1, 0, 1, "none",
                       nhwc_in=True, nhwc_out=True, out_dtype=jnp.float32)
        conf0 = conf0.transpose(0, 3, 1, 2)                      # (B,1,H,W)
    else:
        xd = conv2d(h_nhwc, p["dh_w0"], None, 1, 2, 2, "relu",
                    nhwc_in=True, nhwc_out=True)
    xd = conv2d(xd, p["dh_w1"], None, 1, 0, 1, "relu",
                nhwc_in=True, nhwc_out=True)
    logits = conv2d(xd, p["dh_w2"], p["dh_b2"], 1, 0, 1, "none",
                    nhwc_in=True, nhwc_out=True, out_dtype=jnp.float32)
    nd, prob = depth_regression(logits, RADIUS, OUT_NUM_SAMPLES, want_prob)
    return nd, prob, conf0


def evaluation_first(p, ref_feature, src_features, ref_proj, src_projs,
                     depth_sample, idmin, idmax):
    ref3 = ref_feature["level3"]
    N = depth_sample.shape[1]
    corr_sum, vw_sum = 0.0, 1e-5
    vws = []
    for src_fea, src_pr in zip(src_features["level3"], src_projs["level3"]):
        # TODO(synk): fuse warp gather + group correlation into one Pallas kernel
        # to avoid materializing the warped (B,C,N,H,W) volume in HBM.
        warped = differentiable_warping(src_fea, src_pr, ref_proj["level3"],
                                        depth_sample)
        corr = group_correlation(warped, ref3, G)               # (B,G,N,H,W)
        vw = pixel_view_weight(p["pvw"], corr)                  # (B,1,H,W)
        vws.append(interpolate_bilinear(vw, 2.0))
        corr_sum = corr_sum + corr * vw[:, :, None]
        vw_sum = vw_sum + vw[:, :, None]
    corr = corr_sum / vw_sum
    corr = corrnet(p["corrnet"][2], corr)                       # corr_conv1[-1]
    view_weights = jnp.concatenate(vws, axis=1)
    index = softmax_expectation(corr)
    normalized_depth = index / (N - 1.0)
    depth = depth_unnormalization(normalized_depth, idmin, idmax)
    depth = interpolate_bilinear(depth, 2.0)
    return view_weights, corr, depth


def evaluation_iter(p, ref_feature, src_features, ref_proj, src_projs,
                    samples, view_weights):
    corrs = []
    for l in range(1, 4):
        ref_l = ref_feature[f"level{l}"]
        ds = samples[f"level{l}"]
        B, N, H, W = ds.shape
        if l != 2:
            ref_l = interpolate_bilinear(ref_l, 2.0 ** (l - 2))
        corr_sum, vw_sum = 0.0, 1e-5
        for i, (src_fea, src_pr) in enumerate(zip(src_features[f"level{l}"],
                                                  src_projs[f"level{l}"])):
            warped = differentiable_warping(src_fea, src_pr,
                                            ref_proj[f"level{l}"], ds)
            corr = group_correlation(warped, ref_l, G)
            vw = view_weights[:, i].reshape(B, 1, 1, H, W)
            corr_sum = corr_sum + corr * vw
            vw_sum = vw_sum + vw
        corr = corr_sum / vw_sum
        corrs.append(corrnet(p["corrnet"][l - 1], corr))
    return jnp.concatenate(corrs, axis=1)


def update_hidden_init(p, corr):
    h = conv2d(corr, p["hih_w0"], None, 1, 1, 1, "relu", nhwc_out=True)
    h = conv2d(h, p["hih_w1"], p["hih_b1"], 1, 0, 1, "none",
               nhwc_in=True, out_dtype=jnp.float32)          # NCHW out
    h = interpolate_bilinear(h, 2.0)
    return jnp.tanh(h)                                       # (B,32,H,W)


def update_bias_init(p, x):
    h = conv2d(x, p["hbh_w0"], None, 1, 1, 1, "relu", nhwc_out=True)
    h = conv2d(h, p["hbh_w1"], p["hbh_b1"], 1, 0, 1, "none",
               nhwc_in=True, nhwc_out=True, out_dtype=jnp.float32)
    return jnp.maximum(h, 0.0)                               # NHWC (B,H,W,32)


def update_forward(p, h, c, nd, corr, bias_2d, confidence_flag, want_prob=True):
    """h: NHWC hidden (B,H,W,cd); c: flat (M,cd); nd:(B,1,H,W); corr:(B,10,H,W)."""
    B, H, W, cd = h.shape
    x_nhwc = jnp.concatenate([nd, corr], axis=1).transpose(0, 2, 3, 1)
    hx = jnp.concatenate([h, x_nhwc], axis=-1)
    gates = conv2d(hx, p["lstm_w"], p["lstm_b"], 1, 1, 1, "none",
                   nhwc_in=True, nhwc_out=True, out_dtype=jnp.float32)
    M = B * H * W
    h_flat, c_new = lstm_cell(gates.reshape(M, 4 * cd), bias_2d, c, cd)
    h_new = h_flat.reshape(B, H, W, cd)
    nd_new, prob, conf0 = heads_forward(p, h_new, confidence_flag, want_prob)
    conf = jax.nn.sigmoid(conf0) if confidence_flag else None
    return h_new, c_new, nd_new, prob, conf, conf0


# -----------------------------------------------------------------------------
# IterMVS forward
# -----------------------------------------------------------------------------
def itermvs_forward(params, ref_feature, src_features, ref_proj, src_projs,
                    depth_min, depth_max, iteration=2, test=False):
    corr_interval = {
        "level1": jnp.array([-2, -2.0 / 3, 2.0 / 3, 2], jnp.float32).reshape(1, 4, 1, 1),
        "level2": jnp.array([-8, -8.0 / 3, 8.0 / 3, 8], jnp.float32).reshape(1, 4, 1, 1),
        "level3": jnp.array([-32, 32], jnp.float32).reshape(1, 2, 1, 1),
    }
    interval_scale = 1.0 / 256
    B, _, H, W = ref_feature["level2"].shape

    uw = conv2d(ref_feature["level2"], params["up_w0"], None, 1, 1, 1, "relu",
                nhwc_out=True)
    uw = conv2d(uw, params["up_w1"], None, 1, 0, 1, "none", nhwc_in=True,
                out_dtype=jnp.float32)                         # (B,144,H,W)
    upsample_weight = jax.nn.softmax(uw.reshape(B, 1, 9, 4, 4, H, W), axis=2)

    idmin = (1.0 / depth_min).reshape(B, 1, 1, 1)
    idmax = (1.0 / depth_max).reshape(B, 1, 1, 1)

    # depth initialization at half resolution of level2
    h3, w3 = H // 2, W // 2
    idx = jnp.arange(NUM_SAMPLE, dtype=jnp.float32).reshape(1, NUM_SAMPLE, 1, 1)
    norm_sample = jnp.broadcast_to(idx, (B, NUM_SAMPLE, h3, w3)) / (NUM_SAMPLE - 1)
    depth_samples = 1.0 / (idmax + norm_sample * (idmin - idmax))

    view_weights, corr, depth = evaluation_first(
        params["eval"], ref_feature, src_features, ref_proj, src_projs,
        depth_samples, idmin, idmax)

    depths = {"combine": [], "probability": [], "initial": []}
    confidences, depths_upsampled = [], []
    confidence_upsampled = None
    depth_upsampled = None
    confidence = None

    if not test:
        depths["initial"].append(depth)

    up = params["update"]
    h_nchw = update_hidden_init(up, corr)
    h = h_nchw.transpose(0, 2, 3, 1)                       # NHWC hidden state
    c = h.reshape(B * H * W, HIDDEN_DIM)                   # flat cell state
    bias_nhwc = update_bias_init(up, ref_feature["level2"])
    bias_full = conv2d(bias_nhwc, params["bias_w"], params["bias_b"], 1, 1, 1,
                       "none", nhwc_in=True, nhwc_out=True,
                       out_dtype=jnp.float32)              # (B,H,W,128)
    bias_2d = bias_full.reshape(B * H * W, 4 * HIDDEN_DIM)

    normalized_depth, probability, confidence_0 = heads_forward(
        up, h, want_conf=not test, want_prob=not test)

    if not test:
        confidence = jax.nn.sigmoid(confidence_0)
        depth = depth_unnormalization(normalized_depth, idmin, idmax)
        depths["combine"].append(depth)
        depths["probability"].append(probability)
        confidences.append(confidence_0)

    for it in range(iteration):
        samples = {}
        for i in range(1, 4):
            ns = normalized_depth + corr_interval[f"level{i}"] * interval_scale
            ns = jnp.clip(ns, 0.0, 1.0)
            samples[f"level{i}"] = depth_unnormalization(ns, idmin, idmax)
        corr = evaluation_iter(params["eval"], ref_feature, src_features,
                               ref_proj, src_projs, samples, view_weights)
        if not test:
            h, c, normalized_depth, probability, confidence, confidence_0 = \
                update_forward(up, h, c, normalized_depth, corr, bias_2d,
                               True, want_prob=True)
            depth = depth_unnormalization(normalized_depth, idmin, idmax)
            depths["combine"].append(depth)
            depths["probability"].append(probability)
            confidences.append(confidence_0)
            if it == iteration - 1:
                du = convex_upsample(normalized_depth, upsample_weight)
                du = depth_unnormalization(du, idmin, idmax)
                depths_upsampled.append(du)
                confidence_upsampled = interpolate_bilinear(confidence, 4.0)
        elif it < iteration - 1:
            h, c, normalized_depth, _, _, _ = update_forward(
                up, h, c, normalized_depth, corr, bias_2d, False,
                want_prob=False)
        else:
            depth = depth_unnormalization(normalized_depth, idmin, idmax)
            h, c, normalized_depth, _, confidence, _ = update_forward(
                up, h, c, normalized_depth, corr, bias_2d, True,
                want_prob=False)
            du = convex_upsample(normalized_depth, upsample_weight)
            depth_upsampled = depth_unnormalization(du, idmin, idmax)
            confidence_upsampled = interpolate_bilinear(confidence, 4.0)

    if test:
        return depth, depth_upsampled, confidence, confidence_upsampled
    return depths, depths_upsampled, confidences, confidence_upsampled


# -----------------------------------------------------------------------------
# Deterministic parameter construction
# -----------------------------------------------------------------------------
def make_params(feature_dim=32):
    key = jax.random.PRNGKey(0)
    ctr = [0]

    def nrm(shape, scale=0.1):
        ctr[0] += 1
        return scale * jax.random.normal(jax.random.fold_in(key, ctr[0]), shape,
                                         jnp.float32)

    def corrnet_params():
        return {
            "w0": nrm((8, G, 3, 3)),
            "w1": nrm((16, 8, 3, 3)),
            "w2": nrm((32, 16, 3, 3)),
            "w3": nrm((32, 16, 3, 3)),     # ConvTranspose2d weight (Cin,Cout,3,3)
            "w4": nrm((16, 8, 3, 3)),
            "w5": nrm((1, 8, 3, 3)),
            "b5": nrm((1,), 0.01),
        }

    params = {
        "eval": {
            "pvw": {"w0": nrm((16, G, 3, 3)), "w1": nrm((1, 16, 1, 1)),
                    "b1": nrm((1,), 0.01)},
            "corrnet": [corrnet_params(), corrnet_params(), corrnet_params()],
        },
        "update": {
            "lstm_w": nrm((4 * HIDDEN_DIM, HIDDEN_DIM + 11, 3, 3)),
            "lstm_b": nrm((4 * HIDDEN_DIM,), 0.01),
            "dh_w0": nrm((32, HIDDEN_DIM, 3, 3)),
            "dh_w1": nrm((64, 32, 1, 1)),
            "dh_w2": nrm((OUT_NUM_SAMPLES, 64, 1, 1)),
            "dh_b2": nrm((OUT_NUM_SAMPLES,), 0.01),
            "ch_w0": nrm((32, HIDDEN_DIM, 3, 3)),
            "ch_w1": nrm((1, 32, 1, 1)),
            "ch_b1": nrm((1,), 0.01),
            "hih_w0": nrm((64, NUM_SAMPLE, 3, 3)),
            "hih_w1": nrm((HIDDEN_DIM, 64, 1, 1)),
            "hih_b1": nrm((HIDDEN_DIM,), 0.01),
            "hbh_w0": nrm((64, NUM_SAMPLE, 3, 3)),
            "hbh_w1": nrm((HIDDEN_DIM, 64, 1, 1)),
            "hbh_b1": nrm((HIDDEN_DIM,), 0.01),
        },
        "bias_w": nrm((32 * 4, 32, 3, 3)),
        "bias_b": nrm((32 * 4,), 0.01),
        "up_w0": nrm((64, feature_dim, 3, 3)),
        "up_w1": nrm((16 * 9, 64, 1, 1)),
    }
    return params


# -----------------------------------------------------------------------------
# Main
# -----------------------------------------------------------------------------
if __name__ == "__main__":
    key = jax.random.PRNGKey(0)
    B = 2
    dims = {"level1": 8, "level2": 32, "level3": 16}
    sizes = {"level1": (16, 16), "level2": (8, 8), "level3": (4, 4)}
    n_src = 2

    kc = [0]

    def rand(shape):
        kc[0] += 1
        return jax.random.normal(jax.random.fold_in(key, 1000 + kc[0]), shape,
                                 jnp.float32)

    def make_proj(tx, ty):
        m = jnp.eye(4, dtype=jnp.float32).at[0, 3].set(tx).at[1, 3].set(ty)
        return jnp.broadcast_to(m, (B, 4, 4))

    ref_feature, src_features, ref_proj, src_projs = {}, {}, {}, {}
    for l in ("level1", "level2", "level3"):
        h, w = sizes[l]
        d = dims[l]
        ref_feature[l] = rand((B, d, h, w))
        src_features[l] = [rand((B, d, h, w)) for _ in range(n_src)]
        ref_proj[l] = make_proj(0.0, 0.0)
        src_projs[l] = [make_proj(0.3, 0.1), make_proj(-0.2, 0.15)]

    depth_min = jnp.array([0.5, 0.6], jnp.float32)
    depth_max = jnp.array([2.0, 2.5], jnp.float32)

    params = make_params(feature_dim=dims["level2"])

    out = itermvs_forward(params, ref_feature, src_features, ref_proj, src_projs,
                          depth_min, depth_max, iteration=2, test=False)
    jax.block_until_ready(out)
    print("KERNEL_OK")
</pallas_src>

<mosaic_0001>
module attributes {stable_mosaic.version = 11 : i64} {
  func.func @_mm_kernel(%arg0: i32, %arg1: i32, %arg2: i32, %arg3: memref<128x128xbf16, #tpu.memory_space<vmem>>, %arg4: memref<128x128xbf16, #tpu.memory_space<vmem>>, %arg5: memref<1x128xf32, #tpu.memory_space<vmem>>, %arg6: memref<128x64xbf16, #tpu.memory_space<vmem>>, %arg7: memref<128x128xf32, #tpu.memory_space<vmem>>) attributes {dimension_semantics = [#tpu.dimension_semantics<parallel>, #tpu.dimension_semantics<parallel>, #tpu.dimension_semantics<arbitrary>], iteration_bounds = array<i64: 1, 1, 3>, scalar_prefetch = 0 : i64, scratch_operands = 1 : i64, tpu.core_type = #tpu.core_type<tc>, window_params = [{transform_indices = @transform_0, window_bounds = array<i64: 128, 128>}, {transform_indices = @transform_1, window_bounds = array<i64: 128, 128>}, {transform_indices = @transform_2, window_bounds = array<i64: 1, 128>}, {transform_indices = @transform_3, window_bounds = array<i64: 128, 64>}]} {
    %c0_i32 = arith.constant 0 : i32
    %0 = arith.cmpi eq, %arg2, %c0_i32 : i32
    %1 = arith.extui %0 : i1 to i32
    %c0_i32_0 = arith.constant 0 : i32
    %2 = arith.cmpi ne, %1, %c0_i32_0 : i32
    scf.if %2 {
      %cst_9 = arith.constant 0.000000e+00 : f32
      %12 = vector.broadcast %cst_9 : f32 to vector<128x128xf32>
      %c0_10 = arith.constant 0 : index
      %c0_11 = arith.constant 0 : index
      %13 = vector.load %arg7[%c0_10, %c0_11] : memref<128x128xf32, #tpu.memory_space<vmem>>, vector<128x128xf32>
      tpu.vector_store %arg7[%c0_10, %c0_11], %12 {strides = array<i32>} : memref<128x128xf32, #tpu.memory_space<vmem>>, vector<128x128xf32>,
    } else {
    }
    %c0 = arith.constant 0 : index
    %c0_1 = arith.constant 0 : index
    %3 = vector.load %arg7[%c0, %c0_1] : memref<128x128xf32, #tpu.memory_space<vmem>>, vector<128x128xf32>
    %c0_2 = arith.constant 0 : index
    %c0_3 = arith.constant 0 : index
    %4 = vector.load %arg3[%c0_2, %c0_3] : memref<128x128xbf16, #tpu.memory_space<vmem>>, vector<128x128xbf16>
    %c0_4 = arith.constant 0 : index
    %c0_5 = arith.constant 0 : index
    %5 = vector.load %arg4[%c0_4, %c0_5] : memref<128x128xbf16, #tpu.memory_space<vmem>>, vector<128x128xbf16>
    %cst = arith.constant dense<0.000000e+00> : vector<128x128xf32>
    %6 = tpu.matmul %4, %5, %cst {dimension_numbers = #tpu.dot_dimension_numbers<[1], [0], [0], [1], [0, 0, 1, 1], [], []>} : vector<128x128xbf16>, vector<128x128xbf16>, vector<128x128xf32> -> vector<128x128xf32>
    %7 = arith.addf %3, %6 : vector<128x128xf32>
    %c0_6 = arith.constant 0 : index
    %c0_7 = arith.constant 0 : index
    %8 = vector.load %arg7[%c0_6, %c0_7] : memref<128x128xf32, #tpu.memory_space<vmem>>, vector<128x128xf32>
    tpu.vector_store %arg7[%c0_6, %c0_7], %7 {strides = array<i32>} : memref<128x128xf32, #tpu.memory_space<vmem>>, vector<128x128xf32>,
    %c2_i32 = arith.constant 2 : i32
    %9 = arith.cmpi eq, %arg2, %c2_i32 : i32
    %10 = arith.extui %9 : i1 to i32
    %c0_i32_8 = arith.constant 0 : i32
    %11 = arith.cmpi ne, %10, %c0_i32_8 : i32
    scf.if %11 {
      %c0_9 = arith.constant 0 : index
      %c0_10 = arith.constant 0 : index
      %12 = vector.load %arg7[%c0_9, %c0_10] : memref<128x128xf32, #tpu.memory_space<vmem>>, vector<128x128xf32>
      %c0_11 = arith.constant 0 : index
      %c0_12 = arith.constant 0 : index
      %13 = vector.load %arg5[%c0_11, %c0_12] : memref<1x128xf32, #tpu.memory_space<vmem>>, vector<1x128xf32>
      %14 = vector.broadcast %13 : vector<1x128xf32> to vector<128x128xf32>
      %15 = arith.addf %12, %14 : vector<128x128xf32>
      %cst_13 = arith.constant 0.000000e+00 : f32
      %16 = vector.broadcast %cst_13 : f32 to vector<128x128xf32>
      %17 = arith.maximumf %15, %16 : vector<128x128xf32>
      %18 = vector.extract_strided_slice %17 {offsets = [0, 0], sizes = [128, 64], strides = [1, 1]} : vector<128x128xf32> to vector<128x64xf32>
      %19 = arith.truncf %18 : vector<128x64xf32> to vector<128x64xbf16>
      %c0_14 = arith.constant 0 : index
      %c0_15 = arith.constant 0 : index
      %20 = vector.load %arg6[%c0_14, %c0_15] : memref<128x64xbf16, #tpu.memory_space<vmem>>, vector<128x64xbf16>
      tpu.vector_store %arg6[%c0_14, %c0_15], %19 {strides = array<i32>} : memref<128x64xbf16, #tpu.memory_space<vmem>>, vector<128x64xbf16>,
    } else {
    }
    return
  }
  func.func @transform_0(%arg0: i32, %arg1: i32, %arg2: i32) -> (i32, i32) {
    %c0_i32 = arith.constant 0 : i32
    return %arg0, %arg2 : i32, i32
  }
  func.func @transform_1(%arg0: i32, %arg1: i32, %arg2: i32) -> (i32, i32) {
    %c0_i32 = arith.constant 0 : i32
    return %arg2, %arg1 : i32, i32
  }
  func.func @transform_2(%arg0: i32, %arg1: i32, %arg2: i32) -> (i32, i32) {
    %c0_i32 = arith.constant 0 : i32
    %c0_i32_0 = arith.constant 0 : i32
    return %c0_i32, %arg1 : i32, i32
  }
  func.func @transform_3(%arg0: i32, %arg1: i32, %arg2: i32) -> (i32, i32) {
    %c0_i32 = arith.constant 0 : i32
    return %arg0, %arg1 : i32, i32
  }
}

</mosaic_0001>

<llo_original>
// kernel: tpu_custom_call.1
$region0: #{tpu_custom_call.1}
  #allocation0 [shape = 'u32[]', space=smem, size = 0x4, offset = 0x4, fixed_abs, tag = 'smem constant byte address 0x4 - core index']
  #allocation1 [shape = 'u32[144,128]{1,0:T(1,128)}', space=vmem, size = 0x12000, scoped, tag = 'internal scratch']
  #allocation2 [shape = 'f32[128,128]{1,0:T(8,128)}', space=vmem, size = 0x10000, scoped, tag = 'scratch operand']
  %s0 = inlined_call_operand.hbm [shape: bf16[128,384], index: 0, kind: input, shape index: {}]
  %s1 = inlined_call_operand.hbm [shape: bf16[384,128], index: 1, kind: input, shape index: {}]
  %s2 = inlined_call_operand.vmem [shape: f32[1,128], index: 2, kind: input, shape index: {}]
  %s3 = inlined_call_operand.vmem [shape: bf16[128,64], index: 3, kind: output, shape index: {}]
  %s4 = sld [smem:[#allocation0]]
  $region61: #{tpu_custom_call.1} parent=0
    _
  %s6 = ssub.s32 1, %s4
  %s7 = scalar_select 0, %s6, %s4
  $region1: #{tpu_custom_call.1} parent=0
    #allocation3 [shape = 'u8[65536]{0}', space=vmem, size = 0x10000, scoped, tag = 'input window, operand 0']
    #allocation4 [shape = 's32[2]{0}', space=sflag, size = 0x8, scoped, tag = 'scoped memory for tpu_custom_call.1']
    #allocation5 [shape = 'u8[65536]{0}', space=vmem, size = 0x10000, scoped, tag = 'input window, operand 1']
    #allocation6 [shape = 's32[2]{0}', space=sflag, size = 0x8, scoped, tag = 'scoped memory for tpu_custom_call.1']
    %8 = vsyncpa [#allocation4], 0
    %s9 = scalar_lea.sflag [#allocation4], 1
    %10 = vsyncpa %s9, 0
    %11 = vsyncpa [#allocation6], 0
    %s12 = scalar_lea.sflag [#allocation6], 1
    %13 = vsyncpa %s12, 0
    loop: start=0, step=1, limit=5
    $region2: #{tpu_custom_call.1} parent=1 // loop_pre_header
      _
    $region3: #{tpu_custom_call.1} parent=1 // loop_header
      %s15 = sphi 0, %s19
      %p16 = scmp.ge.s32.totalorder %s15, 5
      %s22 = sphi 0, %s41
      %s23 = sphi 0, %s37
      %s24 = sphi 0, %s33
      %s25 = sphi 0, %s22
      %s26 = sphi 0, %s23
      %s27 = sphi 0, %s24
      %s28 = sphi 0, %s25
      %s29 = sphi 0, %s26
      %s30 = sphi 0, %s27
      %s46 = sphi 0, %s48
      %s49 = sphi 0, %s46
      %s50 = sphi 0, %s49
      %s66 = sphi 0, %s50
      %s74 = sphi 0, %s76
      %s77 = sphi 0, %s74
      %s78 = sphi 0, %s77
      %s94 = sphi 0, %s78
      %s100 = sphi 0, %s102
      %s103 = sphi 0, %s100
      %s104 = sphi 0, %s103
      %s120 = sphi 0, %s104
      %s128 = sphi 0, %s130
      %s131 = sphi 0, %s128
      %s132 = sphi 0, %s131
      %s148 = sphi 0, %s132
    $region4: #{tpu_custom_call.1} parent=1 // loop_header_branch
      %18 = sbr.rel (%p16) target = $region8
    $region5: #{tpu_custom_call.1} parent=1 // loop_body
      %s20 = ssub.s32 %s15, 1
      %s21 = ssub.s32 %s15, 2
      %s31 = sadd.s32 1, %s24
      %p32 = scmp.ge.s32.totalorder %s31, 3
      %s33 = scalar_select %p32, 0, %s31
      %s34 = sadd.s32 1, %s23
      %s35 = scalar_select %p32, %s34, %s23
      %p36 = scmp.ge.s32.totalorder %s35, 1
      %s37 = scalar_select %p36, 0, %s35
      %s38 = sadd.s32 1, %s22
      %s39 = scalar_select %p36, %s38, %s22
      %p40 = scmp.ge.s32.totalorder %s39, 1
      %s41 = scalar_select %p40, 0, %s39
      %s42 = ssub.s32 %s22, %s41
      %s43 = ssub.s32 %s24, %s33
      %s44 = sor.u32 %s42, %s43
      %p45 = scmp.eq.s32.totalorder %s44, 0
      %s47 = sadd.s32 %s46, 1
      %s48 = scalar_select %p45, %s46, %s47
      %p51 = pneg %p45
      %p52 = scmp.eq.s32.totalorder %s15, 2
      %p53 = por %p51, %p52
      %p54 = scmp.ne.s32.totalorder %s46, %s49
      %p55 = scmp.eq.s32.totalorder %s15, 0
      %p56 = por %p54, %p55
      %p57 = scmp.ne.s32.totalorder %s46, %s49
      %p58 = scmp.eq.s32.totalorder %s20, 2
      %p59 = por %p57, %p58
      %p60 = scmp.ne.s32.totalorder %s49, %s50
      %p61 = scmp.eq.s32.totalorder %s20, 0
      %p62 = por %p60, %p61
      %p63 = scmp.ne.s32.totalorder %s49, %s50
      %p64 = scmp.eq.s32.totalorder %s21, 2
      %p65 = por %p63, %p64
      %p67 = scmp.ne.s32.totalorder %s50, %s66
      %p68 = scmp.eq.s32.totalorder %s21, 0
      %p69 = por %p67, %p68
      %s70 = ssub.s32 %s24, %s33
      %s71 = ssub.s32 %s23, %s37
      %s72 = sor.u32 %s70, %s71
      %p73 = scmp.eq.s32.totalorder %s72, 0
      %s75 = sadd.s32 %s74, 1
      %s76 = scalar_select %p73, %s74, %s75
      %p79 = pneg %p73
      %p80 = scmp.eq.s32.totalorder %s15, 2
      %p81 = por %p79, %p80
      %p82 = scmp.ne.s32.totalorder %s74, %s77
      %p83 = scmp.eq.s32.totalorder %s15, 0
      %p84 = por %p82, %p83
      %p85 = scmp.ne.s32.totalorder %s74, %s77
      %p86 = scmp.eq.s32.totalorder %s20, 2
      %p87 = por %p85, %p86
      %p88 = scmp.ne.s32.totalorder %s77, %s78
      %p89 = scmp.eq.s32.totalorder %s20, 0
      %p90 = por %p88, %p89
      %p91 = scmp.ne.s32.totalorder %s77, %s78
      %p92 = scmp.eq.s32.totalorder %s21, 2
      %p93 = por %p91, %p92
      %p95 = scmp.ne.s32.totalorder %s78, %s94
      %p96 = scmp.eq.s32.totalorder %s21, 0
      %p97 = por %p95, %p96
      %s98 = ssub.s32 %s23, %s37
      %p99 = scmp.eq.s32.totalorder %s98, 0
      %s101 = sadd.s32 %s100, 1
      %s102 = scalar_select %p99, %s100, %s101
      %p105 = pneg %p99
      %p106 = scmp.eq.s32.totalorder %s15, 2
      %p107 = por %p105, %p106
      %p108 = scmp.ne.s32.totalorder %s100, %s103
      %p109 = scmp.eq.s32.totalorder %s15, 0
      %p110 = por %p108, %p109
      %p111 = scmp.ne.s32.totalorder %s100, %s103
      %p112 = scmp.eq.s32.totalorder %s20, 2
      %p113 = por %p111, %p112
      %p114 = scmp.ne.s32.totalorder %s103, %s104
      %p115 = scmp.eq.s32.totalorder %s20, 0
      %p116 = por %p114, %p115
      %p117 = scmp.ne.s32.totalorder %s103, %s104
      %p118 = scmp.eq.s32.totalorder %s21, 2
      %p119 = por %p117, %p118
      %p121 = scmp.ne.s32.totalorder %s104, %s120
      %p122 = scmp.eq.s32.totalorder %s21, 0
      %p123 = por %p121, %p122
      %s124 = ssub.s32 %s22, %s41
      %s125 = ssub.s32 %s23, %s37
      %s126 = sor.u32 %s124, %s125
      %p127 = scmp.eq.s32.totalorder %s126, 0
      %s129 = sadd.s32 %s128, 1
      %s130 = scalar_select %p127, %s128, %s129
      %p133 = pneg %p127
      %p134 = scmp.eq.s32.totalorder %s15, 2
      %p135 = por %p133, %p134
      %p136 = scmp.ne.s32.totalorder %s128, %s131
      %p137 = scmp.eq.s32.totalorder %s15, 0
      %p138 = por %p136, %p137
      %p139 = scmp.ne.s32.totalorder %s128, %s131
      %p140 = scmp.eq.s32.totalorder %s20, 2
      %p141 = por %p139, %p140
      %p142 = scmp.ne.s32.totalorder %s131, %s132
      %p143 = scmp.eq.s32.totalorder %s20, 0
      %p144 = por %p142, %p143
      %p145 = scmp.ne.s32.totalorder %s131, %s132
      %p146 = scmp.eq.s32.totalorder %s21, 2
      %p147 = por %p145, %p146
      %p149 = scmp.ne.s32.totalorder %s132, %s148
      %p150 = scmp.eq.s32.totalorder %s21, 0
      %p151 = por %p149, %p150
      %p152 = scmp.le.s32.totalorder 1, %s15
      %p153 = scmp.lt.s32.totalorder %s15, 4
      %p154 = pnand %p152, %p153
      %p155 = pneg %p154
      // Predicated region
      $region9: #{tpu_custom_call.1} parent=5 // pred_check
        _
      $region10: #{tpu_custom_call.1} parent=5 // pred_check_branch
        %157 = sbr.rel (%p154) target = $region12
      $region11: #{tpu_custom_call.1} parent=5 // pred_region
        %s158 = ssub.s32 %s15, 1
        // Predicated region
        $region13: #{tpu_custom_call.1} parent=11 // pred_check
          %p159 = pneg %p116
        $region14: #{tpu_custom_call.1} parent=11 // pred_check_branch
          %161 = sbr.rel (%p159) target = $region16
        $region15: #{tpu_custom_call.1} parent=11 // pred_region
          %p162 = scmp.lt.s32.totalorder %s26, 0
          %s163 = scalar_select %p162, %s26, 0
          %s164 = scalar_lea.vmem %s2, %s163
        $region16: #{tpu_custom_call.1} parent=11 // pred_fallthru
          _
      $region12: #{tpu_custom_call.1} parent=5 // pred_fallthru
        _
      %p165 = scmp.lt.s32.totalorder %s15, 3
      // Predicated region
      $region17: #{tpu_custom_call.1} parent=5 // pred_check
        %p166 = pneg %p165
      $region18: #{tpu_custom_call.1} parent=5 // pred_check_branch
        %168 = sbr.rel (%p166) target = $region20
      $region19: #{tpu_custom_call.1} parent=5 // pred_region
        // Predicated region
        $region21: #{tpu_custom_call.1} parent=19 // pred_check
          %p169 = pneg %p56
        $region22: #{tpu_custom_call.1} parent=19 // pred_check_branch
          %171 = sbr.rel (%p169) target = $region24
        $region23: #{tpu_custom_call.1} parent=19 // pred_region
          %s172 = sand.u32 %s46, 1
          %s173 = scalar_lea.sflag [#allocation4], %s172
          %s174 = sand.u32 %s46, 1
          %s175 = smul.addr %s174, 64
          %s176 = scalar_lea.vmem [#allocation3], %s175
          %s177 = smul.u32 16, %s22
          %s179 = ssub.s32 1024, 1024
          %180 = vsyncadd %s173, %s179
          %s181 = smul.addr %s177, 3
          %s182 = sadd.s32 %s24, %s181
          %s183 = smul.addr %s182, 64
          %s184 = scalar_lea.hbm %s0, %s183
          %s185 = sshll.u32 %s176, 4
          %s186 = int_to_ptr.vmem [resolvable:$true] %s185
          %191 = dma.hbm_to_vmem [thread:$0]  %s184, 1024, %s186, %s173, 192, 64, 4
        $region24: #{tpu_custom_call.1} parent=19 // pred_fallthru
          _
        // Predicated region
        $region25: #{tpu_custom_call.1} parent=19 // pred_check
          %p192 = pneg %p84
        $region26: #{tpu_custom_call.1} parent=19 // pred_check_branch
          %194 = sbr.rel (%p192) target = $region28
        $region27: #{tpu_custom_call.1} parent=19 // pred_region
          %s195 = sand.u32 %s74, 1
          %s196 = scalar_lea.sflag [#allocation6], %s195
          %s197 = sand.u32 %s74, 1
          %s198 = smul.addr %s197, 64
          %s199 = scalar_lea.vmem [#allocation5], %s198
          %s200 = smul.u32 16, %s24
          %s202 = ssub.s32 1024, 1024
          %203 = vsyncadd %s196, %s202
          %s204 = sadd.s32 %s23, %s200
          %s205 = smul.addr %s204, 64
          %s206 = scalar_lea.hbm %s1, %s205
          %s207 = sshll.u32 %s199, 4
          %s208 = int_to_ptr.vmem [resolvable:$true] %s207
          %213 = dma.hbm_to_vmem [thread:$0]  %s206, 1024, %s208, %s196, 64, 64, 4
        $region28: #{tpu_custom_call.1} parent=19 // pred_fallthru
          _
      $region20: #{tpu_custom_call.1} parent=5 // pred_fallthru
        _
      %p214 = scmp.le.s32.totalorder 1, %s15
      %p215 = scmp.lt.s32.totalorder %s15, 4
      %p216 = pnand %p214, %p215
      %p217 = pneg %p216
      // Predicated region
      $region29: #{tpu_custom_call.1} parent=5 // pred_check
        _
      $region30: #{tpu_custom_call.1} parent=5 // pred_check_branch
        %219 = sbr.rel (%p216) target = $region32
      $region31: #{tpu_custom_call.1} parent=5 // pred_region
        %s220 = ssub.s32 %s15, 1
        %s221 = sand.u32 %s49, 1
        %s222 = scalar_lea.sflag [#allocation4], %s221
        %s223 = sand.u32 %s49, 1
        %s224 = smul.addr %s223, 64
        %s225 = scalar_lea.vmem [#allocation3], %s224
        // Predicated region
        $region33: #{tpu_custom_call.1} parent=31 // pred_check
          %p226 = pneg %p62
        $region34: #{tpu_custom_call.1} parent=31 // pred_check_branch
          %228 = sbr.rel (%p226) target = $region36
        $region35: #{tpu_custom_call.1} parent=31 // pred_region
          %229 = dma.done %s222, 1024
        $region36: #{tpu_custom_call.1} parent=31 // pred_fallthru
          _
        %s230 = sand.u32 %s77, 1
        %s231 = scalar_lea.sflag [#allocation6], %s230
        %s232 = sand.u32 %s77, 1
        %s233 = smul.addr %s232, 64
        %s234 = scalar_lea.vmem [#allocation5], %s233
        // Predicated region
        $region37: #{tpu_custom_call.1} parent=31 // pred_check
          %p235 = pneg %p90
        $region38: #{tpu_custom_call.1} parent=31 // pred_check_branch
          %237 = sbr.rel (%p235) target = $region40
        $region39: #{tpu_custom_call.1} parent=31 // pred_region
          %238 = dma.done %s231, 1024
        $region40: #{tpu_custom_call.1} parent=31 // pred_fallthru
          _
        %s239 = sand.u32 %s49, 1
        %s240 = scalar_lea.sflag [#allocation4], %s239
        %s241 = sand.u32 %s49, 1
        %s242 = smul.addr %s241, 64
        %s243 = scalar_lea.vmem [#allocation3], %s242
        %p244 = pneg %p62
        %p245 = pneg %p59
        %s246 = sand.u32 %s77, 1
        %s247 = scalar_lea.sflag [#allocation6], %s246
        %s248 = sand.u32 %s77, 1
        %s249 = smul.addr %s248, 64
        %s250 = scalar_lea.vmem [#allocation5], %s249
        %p251 = pneg %p90
        %p252 = pneg %p87
        %p253 = scmp.lt.s32.totalorder %s26, 0
        %s254 = scalar_select %p253, %s26, 0
        %s255 = scalar_lea.vmem %s2, %s254
        %p256 = pneg %p116
        %p257 = pneg %p113
        %p258 = pneg %p144
        %p259 = pneg %p141
        %s260 = smul.u32 16, %s25
        %p261 = scmp.lt.s32.totalorder %s260, 15
        %s262 = scalar_select %p261, %s260, 15
        %p263 = scmp.lt.s32.totalorder %s26, 0
        %s264 = scalar_select %p263, %s26, 0
        %s265 = sadd.s32 %s264, %s262
        %s266 = smul.addr %s265, 4
        %s267 = scalar_lea.vmem %s3, %s266
        %s268 = smul.u32 16, %s25
        %s269 = smul.u32 16, %s27
        %p270 = scmp.lt.s32.totalorder %s26, 0
        %s271 = scalar_select %p270, %s26, 0
        %s272 = scalar_lea.vmem %s2, %s271
        %s273 = smul.u32 16, %s25
        %p274 = scmp.lt.s32.totalorder %s273, 15
        %s275 = scalar_select %p274, %s273, 15
        %p276 = scmp.lt.s32.totalorder %s26, 0
        %s277 = scalar_select %p276, %s26, 0
        %s278 = sadd.s32 %s277, %s275
        %s279 = smul.addr %s278, 4
        %s280 = scalar_lea.vmem %s3, %s279
        %s281 = smul.u32 16, %s25
        %p283 = scmp.eq.s32.totalorder %s27, 0
        // Predicated region
        $region41: #{tpu_custom_call.1} parent=31 // pred_check
          %p284 = pneg %p283
        $region42: #{tpu_custom_call.1} parent=31 // pred_check_branch
          %286 = sbr.rel (%p284) target = $region44
        $region43: #{tpu_custom_call.1} parent=31 // pred_region
          %287 = vst [vmem:[#allocation2] sm:$0xff] 0.0
          %288 = vst [vmem:[#allocation2 + $0x8] sm:$0xff] 0.0
          %289 = vst [vmem:[#allocation2 + $0x10] sm:$0xff] 0.0
          %290 = vst [vmem:[#allocation2 + $0x18] sm:$0xff] 0.0
          %291 = vst [vmem:[#allocation2 + $0x20] sm:$0xff] 0.0
          %292 = vst [vmem:[#allocation2 + $0x28] sm:$0xff] 0.0
          %293 = vst [vmem:[#allocation2 + $0x30] sm:$0xff] 0.0
          %294 = vst [vmem:[#allocation2 + $0x38] sm:$0xff] 0.0
          %295 = vst [vmem:[#allocation2 + $0x40] sm:$0xff] 0.0
          %296 = vst [vmem:[#allocation2 + $0x48] sm:$0xff] 0.0
          %297 = vst [vmem:[#allocation2 + $0x50] sm:$0xff] 0.0
          %298 = vst [vmem:[#allocation2 + $0x58] sm:$0xff] 0.0
          %299 = vst [vmem:[#allocation2 + $0x60] sm:$0xff] 0.0
          %300 = vst [vmem:[#allocation2 + $0x68] sm:$0xff] 0.0
          %301 = vst [vmem:[#allocation2 + $0x70] sm:$0xff] 0.0
          %302 = vst [vmem:[#allocation2 + $0x78] sm:$0xff] 0.0
        $region44: #{tpu_custom_call.1} parent=31 // pred_fallthru
          _
        %v303 = vld [vmem:[#allocation2] sm:$0xff]
        %v304 = vld [vmem:[#allocation2 + $0x8] sm:$0xff]
        %v305 = vld [vmem:[#allocation2 + $0x10] sm:$0xff]
        %v306 = vld [vmem:[#allocation2 + $0x18] sm:$0xff]
        %v307 = vld [vmem:[#allocation2 + $0x20] sm:$0xff]
        %v308 = vld [vmem:[#allocation2 + $0x28] sm:$0xff]
        %v309 = vld [vmem:[#allocation2 + $0x30] sm:$0xff]
        %v310 = vld [vmem:[#allocation2 + $0x38] sm:$0xff]
        %v311 = vld [vmem:[#allocation2 + $0x40] sm:$0xff]
        %v312 = vld [vmem:[#allocation2 + $0x48] sm:$0xff]
        %v313 = vld [vmem:[#allocation2 + $0x50] sm:$0xff]
        %v314 = vld [vmem:[#allocation2 + $0x58] sm:$0xff]
        %v315 = vld [vmem:[#allocation2 + $0x60] sm:$0xff]
        %v316 = vld [vmem:[#allocation2 + $0x68] sm:$0xff]
        %v317 = vld [vmem:[#allocation2 + $0x70] sm:$0xff]
        %v318 = vld [vmem:[#allocation2 + $0x78] sm:$0xff]
        %v319 = vld [vmem:[%s225] sm:$0xf]
        %v320 = vld [vmem:[%s225 + $0x4] sm:$0xf]
        %v321 = vld [vmem:[%s225 + $0x8] sm:$0xf]
        %v322 = vld [vmem:[%s225 + $0xc] sm:$0xf]
        %v323 = vld [vmem:[%s225 + $0x10] sm:$0xf]
        %v324 = vld [vmem:[%s225 + $0x14] sm:$0xf]
        %v325 = vld [vmem:[%s225 + $0x18] sm:$0xf]
        %v326 = vld [vmem:[%s225 + $0x1c] sm:$0xf]
        %v327 = vld [vmem:[%s225 + $0x20] sm:$0xf]
        %v328 = vld [vmem:[%s225 + $0x24] sm:$0xf]
        %v329 = vld [vmem:[%s225 + $0x28] sm:$0xf]
        %v330 = vld [vmem:[%s225 + $0x2c] sm:$0xf]
        %v331 = vld [vmem:[%s225 + $0x30] sm:$0xf]
        %v332 = vld [vmem:[%s225 + $0x34] sm:$0xf]
        %v333 = vld [vmem:[%s225 + $0x38] sm:$0xf]
        %v334 = vld [vmem:[%s225 + $0x3c] sm:$0xf]
        %v335 = vld [vmem:[%s234] sm:$0xf]
        %v336 = vld [vmem:[%s234 + $0x4] sm:$0xf]
        %v337 = vld [vmem:[%s234 + $0x8] sm:$0xf]
        %v338 = vld [vmem:[%s234 + $0xc] sm:$0xf]
        %v339 = vld [vmem:[%s234 + $0x10] sm:$0xf]
        %v340 = vld [vmem:[%s234 + $0x14] sm:$0xf]
        %v341 = vld [vmem:[%s234 + $0x18] sm:$0xf]
        %v342 = vld [vmem:[%s234 + $0x1c] sm:$0xf]
        %v343 = vld [vmem:[%s234 + $0x20] sm:$0xf]
        %v344 = vld [vmem:[%s234 + $0x24] sm:$0xf]
        %v345 = vld [vmem:[%s234 + $0x28] sm:$0xf]
        %v346 = vld [vmem:[%s234 + $0x2c] sm:$0xf]
        %v347 = vld [vmem:[%s234 + $0x30] sm:$0xf]
        %v348 = vld [vmem:[%s234 + $0x34] sm:$0xf]
        %v349 = vld [vmem:[%s234 + $0x38] sm:$0xf]
        %v350 = vld [vmem:[%s234 + $0x3c] sm:$0xf]
        %v367 = vunpack.c.l.b16 %v319
        %v368 = vunpack.c.l.b16 %v320
        %v369 = vunpack.c.l.b16 %v321
        %v370 = vunpack.c.l.b16 %v322
        %v371 = vunpack.c.l.b16 %v323
        %v372 = vunpack.c.l.b16 %v324
        %v373 = vunpack.c.l.b16 %v325
        %v374 = vunpack.c.l.b16 %v326
        %v375 = vunpack.c.l.b16 %v327
        %v376 = vunpack.c.l.b16 %v328
        %v377 = vunpack.c.l.b16 %v329
        %v378 = vunpack.c.l.b16 %v330
        %v379 = vunpack.c.l.b16 %v331
        %v380 = vunpack.c.l.b16 %v332
        %v381 = vunpack.c.l.b16 %v333
        %v382 = vunpack.c.l.b16 %v334
        %v383 = vpack.c.b16 %v368, %v367
        %v384 = vpack.c.b16 %v370, %v369
        %v385 = vpack.c.b16 %v372, %v371
        %v386 = vpack.c.b16 %v374, %v373
        %v387 = vpack.c.b16 %v376, %v375
        %v388 = vpack.c.b16 %v378, %v377
        %v389 = vpack.c.b16 %v380, %v379
        %v390 = vpack.c.b16 %v382, %v381
        %v415 = vunpack.c.l.b16 %v335
        %v416 = vunpack.c.l.b16 %v336
        %v417 = vunpack.c.l.b16 %v337
        %v418 = vunpack.c.l.b16 %v338
        %v419 = vunpack.c.l.b16 %v339
        %v420 = vunpack.c.l.b16 %v340
        %v421 = vunpack.c.l.b16 %v341
        %v422 = vunpack.c.l.b16 %v342
        %v423 = vunpack.c.l.b16 %v343
        %v424 = vunpack.c.l.b16 %v344
        %v425 = vunpack.c.l.b16 %v345
        %v426 = vunpack.c.l.b16 %v346
        %v427 = vunpack.c.l.b16 %v347
        %v428 = vunpack.c.l.b16 %v348
        %v429 = vunpack.c.l.b16 %v349
        %v430 = vunpack.c.l.b16 %v350
        %v431 = vpack.c.b16 %v416, %v415
        %v432 = vpack.c.b16 %v418, %v417
        %v433 = vpack.c.b16 %v420, %v419
        %v434 = vpack.c.b16 %v422, %v421
        %v435 = vpack.c.b16 %v424, %v423
        %v436 = vpack.c.b16 %v426, %v425
        %v437 = vpack.c.b16 %v428, %v427
        %v438 = vpack.c.b16 %v430, %v429
        %447 = vmatprep.subr.bf16.mxu0 0
        %448 = vmatpush1.bf16.msra.mxu0 %v438
        %449 = vmatprep.subr.bf16.mxu0 0
        %450 = vmatpush1.bf16.msra.mxu0 %v437
        %451 = vmatprep.subr.bf16.mxu0 0
        %452 = vmatpush1.bf16.msra.mxu0 %v436
        %453 = vmatprep.subr.bf16.mxu0 0
        %454 = vmatpush1.bf16.msra.mxu0 %v435
        %455 = vmatprep.subr.bf16.mxu0 0
        %456 = vmatpush1.bf16.msra.mxu0 %v434
        %457 = vmatprep.subr.bf16.mxu0 0
        %458 = vmatpush1.bf16.msra.mxu0 %v433
        %459 = vmatprep.subr.bf16.mxu0 0
        %460 = vmatpush1.bf16.msra.mxu0 %v432
        %461 = vmatprep.subr.bf16.mxu0 0
        %462 = vmatpush1.bf16.msra.mxu0 %v431
        %463 = vmatprep.subr.bf16.mxu0 0
        %464 = vmatpush2.bf16.msra.mxu0 0
        %465 = vmatprep.subr.bf16.mxu0 0
        %466 = vmatpush2.bf16.msra.mxu0 0
        %467 = vmatprep.subr.bf16.mxu0 0
        %468 = vmatpush2.bf16.msra.mxu0 0
        %469 = vmatprep.subr.bf16.mxu0 0
        %470 = vmatpush2.bf16.msra.mxu0 0
        %471 = vmatprep.subr.bf16.mxu0 0
        %472 = vmatpush2.bf16.msra.mxu0 0
        %473 = vmatprep.subr.bf16.mxu0 0
        %474 = vmatpush2.bf16.msra.mxu0 0
        %475 = vmatprep.subr.bf16.mxu0 0
        %476 = vmatpush2.bf16.msra.mxu0 0
        %477 = vmatprep.subr.bf16.mxu0 0
        %478 = vmatpush2.bf16.msra.mxu0 0
        %479 = vmatprep.mubr.bf16.mxu0 0
        %480 = vmatmul.mubr.bf16.gmra.mxu0 %v383
        %v481 = vpop.f32.mrf.mxu0
        %v482 = vadd.f32 0.0, %v481
        %v483 = vpop.f32.mrf.mxu0
        %v484 = vpop.f32.mrf.mxu0
        %v485 = vadd.f32 0.0, %v484
        %v486 = vpop.f32.mrf.mxu0
        %487 = vmatprep.mubr.bf16.mxu0 0
        %488 = vmatmul.mubr.bf16.gmra.mxu0 %v384
        %v489 = vpop.f32.mrf.mxu0
        %v490 = vadd.f32 0.0, %v489
        %v491 = vpop.f32.mrf.mxu0
        %v492 = vpop.f32.mrf.mxu0
        %v493 = vadd.f32 0.0, %v492
        %v494 = vpop.f32.mrf.mxu0
        %495 = vmatprep.mubr.bf16.mxu0 0
        %496 = vmatmul.mubr.bf16.gmra.mxu0 %v385
        %v497 = vpop.f32.mrf.mxu0
        %v498 = vadd.f32 0.0, %v497
        %v499 = vpop.f32.mrf.mxu0
        %v500 = vpop.f32.mrf.mxu0
        %v501 = vadd.f32 0.0, %v500
        %v502 = vpop.f32.mrf.mxu0
        %503 = vmatprep.mubr.bf16.mxu0 0
        %504 = vmatmul.mubr.bf16.gmra.mxu0 %v386
        %v505 = vpop.f32.mrf.mxu0
        %v506 = vadd.f32 0.0, %v505
        %v507 = vpop.f32.mrf.mxu0
        %v508 = vpop.f32.mrf.mxu0
        %v509 = vadd.f32 0.0, %v508
        %v510 = vpop.f32.mrf.mxu0
        %511 = vmatprep.mubr.bf16.mxu0 0
        %512 = vmatmul.mubr.bf16.gmra.mxu0 %v387
        %v513 = vpop.f32.mrf.mxu0
        %v514 = vadd.f32 0.0, %v513
        %v515 = vpop.f32.mrf.mxu0
        %v516 = vpop.f32.mrf.mxu0
        %v517 = vadd.f32 0.0, %v516
        %v518 = vpop.f32.mrf.mxu0
        %519 = vmatprep.mubr.bf16.mxu0 0
        %520 = vmatmul.mubr.bf16.gmra.mxu0 %v388
        %v521 = vpop.f32.mrf.mxu0
        %v522 = vadd.f32 0.0, %v521
        %v523 = vpop.f32.mrf.mxu0
        %v524 = vpop.f32.mrf.mxu0
        %v525 = vadd.f32 0.0, %v524
        %v526 = vpop.f32.mrf.mxu0
        %527 = vmatprep.mubr.bf16.mxu0 0
        %528 = vmatmul.mubr.bf16.gmra.mxu0 %v389
        %v529 = vpop.f32.mrf.mxu0
        %v530 = vadd.f32 0.0, %v529
        %v531 = vpop.f32.mrf.mxu0
        %v532 = vpop.f32.mrf.mxu0
        %v533 = vadd.f32 0.0, %v532
        %v534 = vpop.f32.mrf.mxu0
        %535 = vmatprep.mubr.bf16.mxu0 0
        %536 = vmatmul.mubr.bf16.gmra.mxu0 %v390
        %v537 = vpop.f32.mrf.mxu0
        %v538 = vadd.f32 0.0, %v537
        %v539 = vpop.f32.mrf.mxu0
        %v540 = vpop.f32.mrf.mxu0
        %v541 = vadd.f32 0.0, %v540
        %v542 = vpop.f32.mrf.mxu0
        %543 = vdwg.mxu0
        %v544 = vadd.f32 %v303, %v482
        %v545 = vadd.f32 %v304, %v485
        %v546 = vadd.f32 %v305, %v490
        %v547 = vadd.f32 %v306, %v493
        %v548 = vadd.f32 %v307, %v498
        %v549 = vadd.f32 %v308, %v501
        %v550 = vadd.f32 %v309, %v506
        %v551 = vadd.f32 %v310, %v509
        %v552 = vadd.f32 %v311, %v514
        %v553 = vadd.f32 %v312, %v517
        %v554 = vadd.f32 %v313, %v522
        %v555 = vadd.f32 %v314, %v525
        %v556 = vadd.f32 %v315, %v530
        %v557 = vadd.f32 %v316, %v533
        %v558 = vadd.f32 %v317, %v538
        %v559 = vadd.f32 %v318, %v541
        %560 = vst [vmem:[#allocation2] sm:$0xff] %v544
        %561 = vst [vmem:[#allocation2 + $0x8] sm:$0xff] %v545
        %562 = vst [vmem:[#allocation2 + $0x10] sm:$0xff] %v546
        %563 = vst [vmem:[#allocation2 + $0x18] sm:$0xff] %v547
        %564 = vst [vmem:[#allocation2 + $0x20] sm:$0xff] %v548
        %565 = vst [vmem:[#allocation2 + $0x28] sm:$0xff] %v549
        %566 = vst [vmem:[#allocation2 + $0x30] sm:$0xff] %v550
        %567 = vst [vmem:[#allocation2 + $0x38] sm:$0xff] %v551
        %568 = vst [vmem:[#allocation2 + $0x40] sm:$0xff] %v552
        %569 = vst [vmem:[#allocation2 + $0x48] sm:$0xff] %v553
        %570 = vst [vmem:[#allocation2 + $0x50] sm:$0xff] %v554
        %571 = vst [vmem:[#allocation2 + $0x58] sm:$0xff] %v555
        %572 = vst [vmem:[#allocation2 + $0x60] sm:$0xff] %v556
        %573 = vst [vmem:[#allocation2 + $0x68] sm:$0xff] %v557
        %574 = vst [vmem:[#allocation2 + $0x70] sm:$0xff] %v558
        %575 = vst [vmem:[#allocation2 + $0x78] sm:$0xff] %v559
        %p576 = scmp.eq.s32.totalorder %s27, 2
        // Predicated region
        $region45: #{tpu_custom_call.1} parent=31 // pred_check
          %p577 = pneg %p576
        $region46: #{tpu_custom_call.1} parent=31 // pred_check_branch
          %579 = sbr.rel (%p577) target = $region48
        $region47: #{tpu_custom_call.1} parent=31 // pred_region
          %v580 = vld [vmem:[#allocation2] sm:$0xff]
          %v581 = vld [vmem:[#allocation2 + $0x8] sm:$0xff]
          %v582 = vld [vmem:[#allocation2 + $0x10] sm:$0xff]
          %v583 = vld [vmem:[#allocation2 + $0x18] sm:$0xff]
          %v584 = vld [vmem:[#allocation2 + $0x20] sm:$0xff]
          %v585 = vld [vmem:[#allocation2 + $0x28] sm:$0xff]
          %v586 = vld [vmem:[#allocation2 + $0x30] sm:$0xff]
          %v587 = vld [vmem:[#allocation2 + $0x38] sm:$0xff]
          %v588 = vld [vmem:[#allocation2 + $0x40] sm:$0xff]
          %v589 = vld [vmem:[#allocation2 + $0x48] sm:$0xff]
          %v590 = vld [vmem:[#allocation2 + $0x50] sm:$0xff]
          %v591 = vld [vmem:[#allocation2 + $0x58] sm:$0xff]
          %v592 = vld [vmem:[#allocation2 + $0x60] sm:$0xff]
          %v593 = vld [vmem:[#allocation2 + $0x68] sm:$0xff]
          %v594 = vld [vmem:[#allocation2 + $0x70] sm:$0xff]
          %v595 = vld [vmem:[#allocation2 + $0x78] sm:$0xff]
          %v596 = vld [vmem:[%s272] sm:$0x1]
          %v598 = vlaneseq
          %v599 = vshrl.u32 %v598, 7
          %v600 = vsub.s32 0, %v599
          %v601 = vrot.slane %v596, %v600
          %v603 = vadd.f32 %v580, %v601
          %v604 = vadd.f32 %v581, %v601
          %v605 = vadd.f32 %v582, %v601
          %v606 = vadd.f32 %v583, %v601
          %v607 = vadd.f32 %v584, %v601
          %v608 = vadd.f32 %v585, %v601
          %v609 = vadd.f32 %v586, %v601
          %v610 = vadd.f32 %v587, %v601
          %v611 = vadd.f32 %v588, %v601
          %v612 = vadd.f32 %v589, %v601
          %v613 = vadd.f32 %v590, %v601
          %v614 = vadd.f32 %v591, %v601
          %v615 = vadd.f32 %v592, %v601
          %v616 = vadd.f32 %v593, %v601
          %v617 = vadd.f32 %v594, %v601
          %v618 = vadd.f32 %v595, %v601
          %v619 = vmax.f32 %v603, 0.0
          %v620 = vmax.f32 %v604, 0.0
          %v621 = vmax.f32 %v605, 0.0
          %v622 = vmax.f32 %v606, 0.0
          %v623 = vmax.f32 %v607, 0.0
          %v624 = vmax.f32 %v608, 0.0
          %v625 = vmax.f32 %v609, 0.0
          %v626 = vmax.f32 %v610, 0.0
          %v627 = vmax.f32 %v611, 0.0
          %v628 = vmax.f32 %v612, 0.0
          %v629 = vmax.f32 %v613, 0.0
          %v630 = vmax.f32 %v614, 0.0
          %v631 = vmax.f32 %v615, 0.0
          %v632 = vmax.f32 %v616, 0.0
          %v633 = vmax.f32 %v617, 0.0
          %v634 = vmax.f32 %v618, 0.0
          %v635 = vpack.c.bf16 %v620, %v619
          %v636 = vpack.c.bf16 %v622, %v621
          %v637 = vpack.c.bf16 %v624, %v623
          %v638 = vpack.c.bf16 %v626, %v625
          %v639 = vpack.c.bf16 %v628, %v627
          %v640 = vpack.c.bf16 %v630, %v629
          %v641 = vpack.c.bf16 %v632, %v631
          %v642 = vpack.c.bf16 %v634, %v633
          %v651 = vunpack.c.l.b16 %v635
          %v652 = vunpack.c.h.b16 %v635
          %v653 = vunpack.c.l.b16 %v636
          %v654 = vunpack.c.h.b16 %v636
          %v655 = vunpack.c.l.b16 %v637
          %v656 = vunpack.c.h.b16 %v637
          %v657 = vunpack.c.l.b16 %v638
          %v658 = vunpack.c.h.b16 %v638
          %v659 = vunpack.c.l.b16 %v639
          %v660 = vunpack.c.h.b16 %v639
          %v661 = vunpack.c.l.b16 %v640
          %v662 = vunpack.c.h.b16 %v640
          %v663 = vunpack.c.l.b16 %v641
          %v664 = vunpack.c.h.b16 %v641
          %v665 = vunpack.c.l.b16 %v642
          %v666 = vunpack.c.h.b16 %v642
          %v667 = vpack.c.b16 %v651, %v651
          %v668 = vpack.c.b16 %v652, %v652
          %v669 = vpack.c.b16 %v653, %v653
          %v670 = vpack.c.b16 %v654, %v654
          %v671 = vpack.c.b16 %v655, %v655
          %v672 = vpack.c.b16 %v656, %v656
          %v673 = vpack.c.b16 %v657, %v657
          %v674 = vpack.c.b16 %v658, %v658
          %v675 = vpack.c.b16 %v659, %v659
          %v676 = vpack.c.b16 %v660, %v660
          %v677 = vpack.c.b16 %v661, %v661
          %v678 = vpack.c.b16 %v662, %v662
          %v679 = vpack.c.b16 %v663, %v663
          %v680 = vpack.c.b16 %v664, %v664
          %v681 = vpack.c.b16 %v665, %v665
          %v682 = vpack.c.b16 %v666, %v666
          %vm699 = vcmask 519168
          %700 = vst.msk [vmem:[%s280] sm:$0xf] %vm699, %v667
          %701 = vst.msk [vmem:[%s280 + $0x4] sm:$0xf] %vm699, %v668
          %702 = vst.msk [vmem:[%s280 + $0x8] sm:$0xf] %vm699, %v669
          %703 = vst.msk [vmem:[%s280 + $0xc] sm:$0xf] %vm699, %v670
          %704 = vst.msk [vmem:[%s280 + $0x10] sm:$0xf] %vm699, %v671
          %705 = vst.msk [vmem:[%s280 + $0x14] sm:$0xf] %vm699, %v672
          %706 = vst.msk [vmem:[%s280 + $0x18] sm:$0xf] %vm699, %v673
          %707 = vst.msk [vmem:[%s280 + $0x1c] sm:$0xf] %vm699, %v674
          %708 = vst.msk [vmem:[%s280 + $0x20] sm:$0xf] %vm699, %v675
          %709 = vst.msk [vmem:[%s280 + $0x24] sm:$0xf] %vm699, %v676
          %710 = vst.msk [vmem:[%s280 + $0x28] sm:$0xf] %vm699, %v677
          %711 = vst.msk [vmem:[%s280 + $0x2c] sm:$0xf] %vm699, %v678
          %712 = vst.msk [vmem:[%s280 + $0x30] sm:$0xf] %vm699, %v679
          %713 = vst.msk [vmem:[%s280 + $0x34] sm:$0xf] %vm699, %v680
          %714 = vst.msk [vmem:[%s280 + $0x38] sm:$0xf] %vm699, %v681
          %715 = vst.msk [vmem:[%s280 + $0x3c] sm:$0xf] %vm699, %v682
        $region48: #{tpu_custom_call.1} parent=31 // pred_fallthru
          _
        %s716 = smul.u32 16, %s25
        %p717 = scmp.lt.s32.totalorder %s716, 15
        %s718 = scalar_select %p717, %s716, 15
        %p719 = scmp.lt.s32.totalorder %s26, 0
        %s720 = scalar_select %p719, %s26, 0
        %s721 = sadd.s32 %s720, %s718
        %s722 = smul.addr %s721, 4
        %s723 = scalar_lea.vmem %s3, %s722
        // Predicated region
        $region49: #{tpu_custom_call.1} parent=31 // pred_check
          %p724 = pneg %p141
        $region50: #{tpu_custom_call.1} parent=31 // pred_check_branch
          %726 = sbr.rel (%p724) target = $region52
        $region51: #{tpu_custom_call.1} parent=31 // pred_region
          %s727 = smul.u32 16, %s25
        $region52: #{tpu_custom_call.1} parent=31 // pred_fallthru
          _
        // Predicated region
        $region53: #{tpu_custom_call.1} parent=31 // pred_check
          %p728 = pneg %p141
        $region54: #{tpu_custom_call.1} parent=31 // pred_check_branch
          %730 = sbr.rel (%p728) target = $region56
        $region55: #{tpu_custom_call.1} parent=31 // pred_region
          %s731 = smul.u32 16, %s25
          %p732 = scmp.lt.s32.totalorder %s731, 15
          %s733 = scalar_select %p732, %s731, 15
          %p734 = scmp.lt.s32.totalorder %s26, 0
          %s735 = scalar_select %p734, %s26, 0
          %s736 = sadd.s32 %s735, %s733
          %s737 = smul.addr %s736, 4
          %s738 = scalar_lea.vmem %s3, %s737
        $region56: #{tpu_custom_call.1} parent=31 // pred_fallthru
          _
      $region32: #{tpu_custom_call.1} parent=5 // pred_fallthru
        _
      %p739 = scmp.le.s32.totalorder 2, %s15
      // Predicated region
      $region57: #{tpu_custom_call.1} parent=5 // pred_check
        %p740 = pneg %p739
      $region58: #{tpu_custom_call.1} parent=5 // pred_check_branch
        %742 = sbr.rel (%p740) target = $region60
      $region59: #{tpu_custom_call.1} parent=5 // pred_region
        %s743 = ssub.s32 %s15, 2
      $region60: #{tpu_custom_call.1} parent=5 // pred_fallthru
        _
    $region6: #{tpu_custom_call.1} parent=1 // loop_footer
      %s19 = sadd.s32 1, %s15
    $region7: #{tpu_custom_call.1} parent=1 // loop_footer_branch
      %14 = sbr.rel target = $region3
    $region8: #{tpu_custom_call.1} parent=1 // loop_exit
      _
    %744 = vsyncpa [#allocation4], 1
    %s745 = scalar_lea.sflag [#allocation4], 1
    %746 = vsyncpa %s745, 1
    %747 = vsyncpa [#allocation6], 1
    %s748 = scalar_lea.sflag [#allocation6], 1
    %749 = vsyncpa %s748, 1

</llo_original>
